<compile_context>
chip_gen: v7x
topology: tpu7x:2x2x1
jax: 0.10.0
libtpu: 0.0.40
codegen_flags: <defaults>
</compile_context>

<pallas_src>
import functools

import jax
import jax.numpy as jnp
import numpy as np
from jax.experimental import pallas as pl
from jax.experimental.pallas import tpu as pltpu

LANES = 128        # boxes per lane row
SUBLANES = 8       # f32 sublanes per vreg -> chunk height and accumulator height
MAX_TM = 512       # max sublane rows per grid step (512*128 = 65536 boxes/step);
                   # double-buffered VMEM footprint ~5.8 MiB -> fits all gens.
PALLAS_MIN_BOXES = 1024   # below this, fused plain-JAX is faster than launch+pad


def _round_up(x, m):
    return ((x + m - 1) // m) * m


def _probiou_partial_kernel(p_ref, t_ref, w_ref, o_ref, *, eps, tm, approx):
    """p_ref/t_ref: (5, tm, 128); w_ref: (tm, 128); o_ref: (8, 128) partial sum.

    Processes the tile in (8,128) chunks; each chunk's l1*weight is added into
    a single-vreg (8,128) accumulator, bounding register pressure.
    """
    n_chunks = tm // SUBLANES

    def chunk_loss(r0):
        sl = pl.ds(r0, SUBLANES)
        x1, y1 = p_ref[0, sl, :], p_ref[1, sl, :]
        a1_ = jnp.square(p_ref[2, sl, :]) * (1.0 / 12.0)
        b1_ = jnp.square(p_ref[3, sl, :]) * (1.0 / 12.0)
        ang1 = p_ref[4, sl, :]

        x2, y2 = t_ref[0, sl, :], t_ref[1, sl, :]
        a2_ = jnp.square(t_ref[2, sl, :]) * (1.0 / 12.0)
        b2_ = jnp.square(t_ref[3, sl, :]) * (1.0 / 12.0)
        ang2 = t_ref[4, sl, :]

        def rotated(a_, b_, ang):
            # Double-angle form: fewer VALU products than cos^2/sin^2/cos*sin.
            two = ang + ang
            c2 = jnp.cos(two)
            s2 = jnp.sin(two)
            mean = 0.5 * (a_ + b_)
            diff = 0.5 * (a_ - b_)
            dc = diff * c2
            return mean + dc, mean - dc, diff * s2

        a1, b1, c1 = rotated(a1_, b1_, ang1)
        a2, b2, c2 = rotated(a2_, b2_, ang2)

        dx = x1 - x2
        dy = y1 - y2
        A = a1 + a2
        B = b1 + b2
        C = c1 + c2

        # 0.5 * C * (x2 - x1) * (y1 - y2) == -0.5 * C * dx * dy
        t1 = 0.25 * (A * dy * dy + B * dx * dx) - 0.5 * (C * dx * dy)
        t2 = A * B - C * C
        t3_ = (a1 * b1 - c1 * c1) * (a2 * b2 - c2 * c2)

        denom = 4.0 * jnp.sqrt(jnp.maximum(t3_, 0.0)) + eps
        if approx:
            # Approx reciprocals go to the EUP slot (kernel is transcendental
            # heavy: cos/sin/log/sqrt/exp per box), freeing VALU.
            inv_t2 = pl.reciprocal(t2, approx=True)
            inv_den = pl.reciprocal(denom, approx=True)
        else:
            inv_t2 = 1.0 / t2
            inv_den = 1.0 / denom

        t3 = 0.5 * jnp.log(t2 * inv_den)
        b_d = jnp.clip(t1 * inv_t2 + t3, eps, 100.0)
        l1 = jnp.sqrt(1.0 - jnp.exp(-b_d))
        return l1 * w_ref[sl, :]

    if n_chunks <= 4:
        # Short, fixed trip count: fully unroll for LLO scheduler visibility.
        acc = chunk_loss(0)
        for k in range(1, n_chunks):
            acc = acc + chunk_loss(k * SUBLANES)
        o_ref[...] = acc
    else:
        # Rolled loop bounds live ranges; accumulator is exactly one vreg.
        def body(k, acc):
            r0 = pl.multiple_of(k * SUBLANES, SUBLANES)
            return acc + chunk_loss(r0)

        o_ref[...] = jax.lax.fori_loop(
            0, n_chunks, body, jnp.zeros((SUBLANES, LANES), jnp.float32))


def probiou_partials_blocked(p_blk, t_blk, w_blk, eps=1e-3, approx_recip=True):
    """Blocked inputs -> lane-dense (num_blocks*8, 128) partial sums of l1*weight.

    p_blk/t_blk: [num_blocks, 5, tm, 128] f32, w_blk: [num_blocks, tm, 128] f32.
    Padded boxes must be finite (e.g. 1,1,1,1,1) with weight 0.
    """
    num_blocks, _, tm, lanes = p_blk.shape
    assert lanes == LANES and tm % SUBLANES == 0
    n_pad = num_blocks * tm * LANES

    kernel = functools.partial(_probiou_partial_kernel, eps=eps, tm=tm,
                               approx=approx_recip)
    cost = pl.CostEstimate(
        flops=150 * n_pad,                 # ~per-box VALU work
        transcendentals=9 * n_pad,         # cos,sin x2 sides + sqrt,log,exp,sqrt,recips
        bytes_accessed=44 * n_pad + num_blocks * SUBLANES * LANES * 4,
    )
    return pl.pallas_call(
        kernel,
        out_shape=jax.ShapeDtypeStruct((num_blocks * SUBLANES, LANES),
                                       jnp.float32),
        grid_spec=pltpu.PrefetchScalarGridSpec(
            num_scalar_prefetch=0,
            grid=(num_blocks,),
            in_specs=[
                # One contiguous slab per grid step per input (block-major).
                pl.BlockSpec((None, 5, tm, LANES), lambda i: (i, 0, 0, 0)),
                pl.BlockSpec((None, 5, tm, LANES), lambda i: (i, 0, 0, 0)),
                pl.BlockSpec((None, tm, LANES), lambda i: (i, 0, 0)),
            ],
            out_specs=pl.BlockSpec((SUBLANES, LANES), lambda i: (i, 0)),
        ),
        compiler_params=pltpu.CompilerParams(
            dimension_semantics=("parallel",)),   # independent blocks -> 2 TCs on v7x
        cost_estimate=cost,
    )(p_blk, t_blk, w_blk)


def _choose_tiling(n):
    m = max(1, pl.cdiv(n, LANES))                 # number of 128-box lane rows
    if m <= SUBLANES:
        tm = SUBLANES
    else:
        # Aim for >= 2 blocks (v7x two-TensorCore sharding), bounded by MAX_TM.
        tm = min(MAX_TM, _round_up(pl.cdiv(m, 2), SUBLANES))
    num_blocks = pl.cdiv(m, tm)
    return tm, num_blocks


def _layout_blocked(pred, target, weight, tm, num_blocks):
    """[N,5]/[N] -> block-major layout. Padded boxes = (1,...,1), weight = 0."""
    n = pred.shape[0]
    n_pad = num_blocks * tm * LANES
    pad = n_pad - n

    def to_blocks(b):
        bt = jnp.pad(b.astype(jnp.float32).T, ((0, 0), (0, pad)),
                     constant_values=1.0)
        return jnp.transpose(bt.reshape(5, num_blocks, tm, LANES), (1, 0, 2, 3))

    p_blk = to_blocks(pred)
    t_blk = to_blocks(target)
    w_blk = jnp.pad(weight.astype(jnp.float32), ((0, pad),)
                    ).reshape(num_blocks, tm, LANES)
    return p_blk, t_blk, w_blk


def _probiou_l1_jax(pred, target, eps=1e-3):
    """Fused plain-JAX per-box l1 loss (small-N fast path + reference)."""
    p = pred.astype(jnp.float32)
    t = target.astype(jnp.float32)
    x1, y1 = p[:, 0], p[:, 1]
    a1_, b1_ = jnp.square(p[:, 2]) / 12.0, jnp.square(p[:, 3]) / 12.0
    ang1 = p[:, 4]
    x2, y2 = t[:, 0], t[:, 1]
    a2_, b2_ = jnp.square(t[:, 2]) / 12.0, jnp.square(t[:, 3]) / 12.0
    ang2 = t[:, 4]

    def rot(a_, b_, ang):
        ca, sa = jnp.cos(ang), jnp.sin(ang)
        return (a_ * ca * ca + b_ * sa * sa,
                a_ * sa * sa + b_ * ca * ca,
                (a_ - b_) * ca * sa)

    a1, b1, c1 = rot(a1_, b1_, ang1)
    a2, b2, c2 = rot(a2_, b2_, ang2)
    t1 = 0.25 * ((a1 + a2) * jnp.square(y1 - y2)
                 + (b1 + b2) * jnp.square(x1 - x2)) \
        + 0.5 * ((c1 + c2) * (x2 - x1) * (y1 - y2))
    t2 = (a1 + a2) * (b1 + b2) - jnp.square(c1 + c2)
    t3_ = (a1 * b1 - c1 * c1) * (a2 * b2 - c2 * c2)
    t3 = 0.5 * jnp.log(t2 / (4.0 * jnp.sqrt(jnp.maximum(t3_, 0.0)) + eps))
    b_d = jnp.clip(t1 / t2 + t3, eps, 100.0)
    return jnp.sqrt(1.0 - jnp.exp(-b_d))


def probiou_loss2_forward(loc_p, loc_t, weight, avg_factor=None,
                          loss_weight=1.0, eps=1e-3, force_pallas=False):
    """Equivalent of ProbiouLoss2.forward (mode='l1', deform=True)."""
    if avg_factor is None:
        avg_factor = 1.0
    n = loc_p.shape[0]
    if n < PALLAS_MIN_BOXES and not force_pallas:
        # Fast path: fixed pad/transpose/launch costs dominate at tiny N.
        s = jnp.sum(_probiou_l1_jax(loc_p, loc_t, eps) * weight)
    else:
        tm, num_blocks = _choose_tiling(n)
        p_blk, t_blk, w_blk = _layout_blocked(loc_p, loc_t, weight,
                                              tm, num_blocks)
        partial = probiou_partials_blocked(p_blk, t_blk, w_blk, eps=eps)
        s = jnp.sum(partial)                      # tiny XLA reduce of partials
    return (loss_weight * s)[None] / avg_factor   # shape [1]


# ---------------- plain-JAX reference (for verification only) ----------------
def _reference_forward(loc_p, loc_t, weight, avg_factor=None,
                       loss_weight=1.0, eps=1e-3):
    if avg_factor is None:
        avg_factor = 1.0
    l1 = _probiou_l1_jax(loc_p, loc_t, eps)
    return (loss_weight * jnp.sum(l1 * weight))[None] / avg_factor


def _make_inputs(key, n):
    k1, k2, k3, k4, k5, k6, k7 = jax.random.split(key, 7)
    xy_p = jax.random.uniform(k1, (n, 2), jnp.float32, -10.0, 10.0)
    wh_p = jax.random.uniform(k2, (n, 2), jnp.float32, 1.0, 6.0)
    ang_p = jax.random.uniform(k3, (n, 1), jnp.float32, -jnp.pi, jnp.pi)
    loc_p = jnp.concatenate([xy_p, wh_p, ang_p], axis=1)

    xy_t = jax.random.uniform(k4, (n, 2), jnp.float32, -10.0, 10.0)
    wh_t = jax.random.uniform(k5, (n, 2), jnp.float32, 1.0, 6.0)
    ang_t = jax.random.uniform(k6, (n, 1), jnp.float32, -jnp.pi, jnp.pi)
    loc_t = jnp.concatenate([xy_t, wh_t, ang_t], axis=1)

    weight = jax.random.uniform(k7, (n,), jnp.float32, 0.0, 1.0)
    return loc_p, loc_t, weight


if __name__ == "__main__":
    key = jax.random.PRNGKey(0)
    k_small, k_mid, k_big, k_fast = jax.random.split(key, 4)

    # Case 1: N = 8 boxes ([N,5] module contract), forced through the Pallas
    # path (single 8x128 block, single chunk).
    loc_p, loc_t, weight = _make_inputs(k_small, 8)
    loss = probiou_loss2_forward(loc_p, loc_t, weight, avg_factor=8.0,
                                 loss_weight=1.0, eps=1e-3, force_pallas=True)
    loss = jax.block_until_ready(loss)
    ref = jax.block_until_ready(
        _reference_forward(loc_p, loc_t, weight, avg_factor=8.0,
                           loss_weight=1.0, eps=1e-3))
    # approx EUP reciprocals -> slightly looser tolerance than exact divides
    np.testing.assert_allclose(np.asarray(loss), np.asarray(ref),
                               rtol=5e-3, atol=5e-4)

    # Case 2: N = 3000 -> Pallas path, 2 blocks (tm=16), unrolled-chunk path.
    loc_p2, loc_t2, weight2 = _make_inputs(k_mid, 3000)
    loss2 = probiou_loss2_forward(loc_p2, loc_t2, weight2, avg_factor=3000.0,
                                  loss_weight=2.0, eps=1e-3)
    loss2 = jax.block_until_ready(loss2)
    ref2 = jax.block_until_ready(
        _reference_forward(loc_p2, loc_t2, weight2, avg_factor=3000.0,
                           loss_weight=2.0, eps=1e-3))
    np.testing.assert_allclose(np.asarray(loss2), np.asarray(ref2),
                               rtol=5e-3, atol=5e-4)

    # Case 3: N = 20000 -> Pallas path, exercises the rolled fori_loop chunking.
    loc_p3, loc_t3, weight3 = _make_inputs(k_big, 20000)
    loss3 = probiou_loss2_forward(loc_p3, loc_t3, weight3, avg_factor=20000.0,
                                  loss_weight=1.0, eps=1e-3)
    loss3 = jax.block_until_ready(loss3)
    ref3 = jax.block_until_ready(
        _reference_forward(loc_p3, loc_t3, weight3, avg_factor=20000.0,
                           loss_weight=1.0, eps=1e-3))
    np.testing.assert_allclose(np.asarray(loss3), np.asarray(ref3),
                               rtol=5e-3, atol=5e-4)

    # Case 4: N = 100 -> small-N JAX fast path (no Pallas launch).
    loc_p4, loc_t4, weight4 = _make_inputs(k_fast, 100)
    loss4 = jax.block_until_ready(
        probiou_loss2_forward(loc_p4, loc_t4, weight4, avg_factor=100.0))
    ref4 = jax.block_until_ready(
        _reference_forward(loc_p4, loc_t4, weight4, avg_factor=100.0))
    np.testing.assert_allclose(np.asarray(loss4), np.asarray(ref4),
                               rtol=1e-5, atol=1e-6)

    print("KERNEL_OK")
</pallas_src>

<mosaic_0001>
module attributes {stable_mosaic.version = 11 : i64} {
  func.func @_probiou_partial_kernel(%arg0: i32, %arg1: memref<1x5x8x128xf32, #tpu.memory_space<vmem>>, %arg2: memref<1x5x8x128xf32, #tpu.memory_space<vmem>>, %arg3: memref<1x8x128xf32, #tpu.memory_space<vmem>>, %arg4: memref<8x128xf32, #tpu.memory_space<vmem>>) attributes {dimension_semantics = [#tpu.dimension_semantics<parallel>], iteration_bounds = array<i64: 1>, scalar_prefetch = 0 : i64, scratch_operands = 0 : i64, tpu.core_type = #tpu.core_type<tc>, window_params = [{transform_indices = @transform_0, window_bounds = array<i64: 1, 5, 8, 128>}, {transform_indices = @transform_1, window_bounds = array<i64: 1, 5, 8, 128>}, {transform_indices = @transform_2, window_bounds = array<i64: 1, 8, 128>}, {transform_indices = @transform_3, window_bounds = array<i64: 8, 128>}]} {
    %c0 = arith.constant 0 : index
    %c0_0 = arith.constant 0 : index
    %c0_1 = arith.constant 0 : index
    %c0_2 = arith.constant 0 : index
    %0 = vector.load %arg1[%c0, %c0_0, %c0_1, %c0_2] : memref<1x5x8x128xf32, #tpu.memory_space<vmem>>, vector<1x1x8x128xf32>
    %1 = vector.shape_cast %0 : vector<1x1x8x128xf32> to vector<8x128xf32>
    %c0_3 = arith.constant 0 : index
    %c1 = arith.constant 1 : index
    %c0_4 = arith.constant 0 : index
    %c0_5 = arith.constant 0 : index
    %2 = vector.load %arg1[%c0_3, %c1, %c0_4, %c0_5] : memref<1x5x8x128xf32, #tpu.memory_space<vmem>>, vector<1x1x8x128xf32>
    %3 = vector.shape_cast %2 : vector<1x1x8x128xf32> to vector<8x128xf32>
    %c0_6 = arith.constant 0 : index
    %c2 = arith.constant 2 : index
    %c0_7 = arith.constant 0 : index
    %c0_8 = arith.constant 0 : index
    %4 = vector.load %arg1[%c0_6, %c2, %c0_7, %c0_8] : memref<1x5x8x128xf32, #tpu.memory_space<vmem>>, vector<1x1x8x128xf32>
    %5 = vector.shape_cast %4 : vector<1x1x8x128xf32> to vector<8x128xf32>
    %6 = arith.mulf %5, %5 : vector<8x128xf32>
    %cst = arith.constant 0.0833333358 : f32
    %7 = vector.broadcast %cst : f32 to vector<8x128xf32>
    %8 = arith.mulf %6, %7 : vector<8x128xf32>
    %c0_9 = arith.constant 0 : index
    %c3 = arith.constant 3 : index
    %c0_10 = arith.constant 0 : index
    %c0_11 = arith.constant 0 : index
    %9 = vector.load %arg1[%c0_9, %c3, %c0_10, %c0_11] : memref<1x5x8x128xf32, #tpu.memory_space<vmem>>, vector<1x1x8x128xf32>
    %10 = vector.shape_cast %9 : vector<1x1x8x128xf32> to vector<8x128xf32>
    %11 = arith.mulf %10, %10 : vector<8x128xf32>
    %cst_12 = arith.constant 0.0833333358 : f32
    %12 = vector.broadcast %cst_12 : f32 to vector<8x128xf32>
    %13 = arith.mulf %11, %12 : vector<8x128xf32>
    %c0_13 = arith.constant 0 : index
    %c4 = arith.constant 4 : index
    %c0_14 = arith.constant 0 : index
    %c0_15 = arith.constant 0 : index
    %14 = vector.load %arg1[%c0_13, %c4, %c0_14, %c0_15] : memref<1x5x8x128xf32, #tpu.memory_space<vmem>>, vector<1x1x8x128xf32>
    %15 = vector.shape_cast %14 : vector<1x1x8x128xf32> to vector<8x128xf32>
    %c0_16 = arith.constant 0 : index
    %c0_17 = arith.constant 0 : index
    %c0_18 = arith.constant 0 : index
    %c0_19 = arith.constant 0 : index
    %16 = vector.load %arg2[%c0_16, %c0_17, %c0_18, %c0_19] : memref<1x5x8x128xf32, #tpu.memory_space<vmem>>, vector<1x1x8x128xf32>
    %17 = vector.shape_cast %16 : vector<1x1x8x128xf32> to vector<8x128xf32>
    %c0_20 = arith.constant 0 : index
    %c1_21 = arith.constant 1 : index
    %c0_22 = arith.constant 0 : index
    %c0_23 = arith.constant 0 : index
    %18 = vector.load %arg2[%c0_20, %c1_21, %c0_22, %c0_23] : memref<1x5x8x128xf32, #tpu.memory_space<vmem>>, vector<1x1x8x128xf32>
    %19 = vector.shape_cast %18 : vector<1x1x8x128xf32> to vector<8x128xf32>
    %c0_24 = arith.constant 0 : index
    %c2_25 = arith.constant 2 : index
    %c0_26 = arith.constant 0 : index
    %c0_27 = arith.constant 0 : index
    %20 = vector.load %arg2[%c0_24, %c2_25, %c0_26, %c0_27] : memref<1x5x8x128xf32, #tpu.memory_space<vmem>>, vector<1x1x8x128xf32>
    %21 = vector.shape_cast %20 : vector<1x1x8x128xf32> to vector<8x128xf32>
    %22 = arith.mulf %21, %21 : vector<8x128xf32>
    %cst_28 = arith.constant 0.0833333358 : f32
    %23 = vector.broadcast %cst_28 : f32 to vector<8x128xf32>
    %24 = arith.mulf %22, %23 : vector<8x128xf32>
    %c0_29 = arith.constant 0 : index
    %c3_30 = arith.constant 3 : index
    %c0_31 = arith.constant 0 : index
    %c0_32 = arith.constant 0 : index
    %25 = vector.load %arg2[%c0_29, %c3_30, %c0_31, %c0_32] : memref<1x5x8x128xf32, #tpu.memory_space<vmem>>, vector<1x1x8x128xf32>
    %26 = vector.shape_cast %25 : vector<1x1x8x128xf32> to vector<8x128xf32>
    %27 = arith.mulf %26, %26 : vector<8x128xf32>
    %cst_33 = arith.constant 0.0833333358 : f32
    %28 = vector.broadcast %cst_33 : f32 to vector<8x128xf32>
    %29 = arith.mulf %27, %28 : vector<8x128xf32>
    %c0_34 = arith.constant 0 : index
    %c4_35 = arith.constant 4 : index
    %c0_36 = arith.constant 0 : index
    %c0_37 = arith.constant 0 : index
    %30 = vector.load %arg2[%c0_34, %c4_35, %c0_36, %c0_37] : memref<1x5x8x128xf32, #tpu.memory_space<vmem>>, vector<1x1x8x128xf32>
    %31 = vector.shape_cast %30 : vector<1x1x8x128xf32> to vector<8x128xf32>
    %32 = arith.addf %15, %15 : vector<8x128xf32>
    %33 = math.cos %32 : vector<8x128xf32>
    %34 = math.sin %32 : vector<8x128xf32>
    %35 = arith.addf %8, %13 : vector<8x128xf32>
    %cst_38 = arith.constant 5.000000e-01 : f32
    %36 = vector.broadcast %cst_38 : f32 to vector<8x128xf32>
    %37 = arith.mulf %36, %35 : vector<8x128xf32>
    %38 = arith.subf %8, %13 : vector<8x128xf32>
    %cst_39 = arith.constant 5.000000e-01 : f32
    %39 = vector.broadcast %cst_39 : f32 to vector<8x128xf32>
    %40 = arith.mulf %39, %38 : vector<8x128xf32>
    %41 = arith.mulf %40, %33 : vector<8x128xf32>
    %42 = arith.addf %37, %41 : vector<8x128xf32>
    %43 = arith.subf %37, %41 : vector<8x128xf32>
    %44 = arith.mulf %40, %34 : vector<8x128xf32>
    %45 = arith.addf %31, %31 : vector<8x128xf32>
    %46 = math.cos %45 : vector<8x128xf32>
    %47 = math.sin %45 : vector<8x128xf32>
    %48 = arith.addf %24, %29 : vector<8x128xf32>
    %cst_40 = arith.constant 5.000000e-01 : f32
    %49 = vector.broadcast %cst_40 : f32 to vector<8x128xf32>
    %50 = arith.mulf %49, %48 : vector<8x128xf32>
    %51 = arith.subf %24, %29 : vector<8x128xf32>
    %cst_41 = arith.constant 5.000000e-01 : f32
    %52 = vector.broadcast %cst_41 : f32 to vector<8x128xf32>
    %53 = arith.mulf %52, %51 : vector<8x128xf32>
    %54 = arith.mulf %53, %46 : vector<8x128xf32>
    %55 = arith.addf %50, %54 : vector<8x128xf32>
    %56 = arith.subf %50, %54 : vector<8x128xf32>
    %57 = arith.mulf %53, %47 : vector<8x128xf32>
    %58 = arith.subf %1, %17 : vector<8x128xf32>
    %59 = arith.subf %3, %19 : vector<8x128xf32>
    %60 = arith.addf %42, %55 : vector<8x128xf32>
    %61 = arith.addf %43, %56 : vector<8x128xf32>
    %62 = arith.addf %44, %57 : vector<8x128xf32>
    %63 = arith.mulf %60, %59 : vector<8x128xf32>
    %64 = arith.mulf %63, %59 : vector<8x128xf32>
    %65 = arith.mulf %61, %58 : vector<8x128xf32>
    %66 = arith.mulf %65, %58 : vector<8x128xf32>
    %67 = arith.addf %64, %66 : vector<8x128xf32>
    %cst_42 = arith.constant 2.500000e-01 : f32
    %68 = vector.broadcast %cst_42 : f32 to vector<8x128xf32>
    %69 = arith.mulf %68, %67 : vector<8x128xf32>
    %70 = arith.mulf %62, %58 : vector<8x128xf32>
    %71 = arith.mulf %70, %59 : vector<8x128xf32>
    %cst_43 = arith.constant 5.000000e-01 : f32
    %72 = vector.broadcast %cst_43 : f32 to vector<8x128xf32>
    %73 = arith.mulf %72, %71 : vector<8x128xf32>
    %74 = arith.subf %69, %73 : vector<8x128xf32>
    %75 = arith.mulf %60, %61 : vector<8x128xf32>
    %76 = arith.mulf %62, %62 : vector<8x128xf32>
    %77 = arith.subf %75, %76 : vector<8x128xf32>
    %78 = arith.mulf %42, %43 : vector<8x128xf32>
    %79 = arith.mulf %44, %44 : vector<8x128xf32>
    %80 = arith.subf %78, %79 : vector<8x128xf32>
    %81 = arith.mulf %55, %56 : vector<8x128xf32>
    %82 = arith.mulf %57, %57 : vector<8x128xf32>
    %83 = arith.subf %81, %82 : vector<8x128xf32>
    %84 = arith.mulf %80, %83 : vector<8x128xf32>
    %cst_44 = arith.constant 0.000000e+00 : f32
    %85 = vector.broadcast %cst_44 : f32 to vector<8x128xf32>
    %86 = arith.maximumf %84, %85 : vector<8x128xf32>
    %87 = math.sqrt %86 : vector<8x128xf32>
    %cst_45 = arith.constant 4.000000e+00 : f32
    %88 = vector.broadcast %cst_45 : f32 to vector<8x128xf32>
    %89 = arith.mulf %88, %87 : vector<8x128xf32>
    %cst_46 = arith.constant 1.000000e-03 : f32
    %90 = vector.broadcast %cst_46 : f32 to vector<8x128xf32>
    %91 = arith.addf %89, %90 : vector<8x128xf32>
    %92 = tpu.reciprocal %77 {approx = true} : vector<8x128xf32> -> vector<8x128xf32>
    %93 = tpu.reciprocal %91 {approx = true} : vector<8x128xf32> -> vector<8x128xf32>
    %94 = arith.mulf %77, %93 : vector<8x128xf32>
    %95 = math.log %94 : vector<8x128xf32>
    %cst_47 = arith.constant 5.000000e-01 : f32
    %96 = vector.broadcast %cst_47 : f32 to vector<8x128xf32>
    %97 = arith.mulf %96, %95 : vector<8x128xf32>
    %98 = arith.mulf %74, %92 : vector<8x128xf32>
    %99 = arith.addf %98, %97 : vector<8x128xf32>
    %cst_48 = arith.constant 1.000000e-03 : f32
    %cst_49 = arith.constant 1.000000e+02 : f32
    %100 = vector.broadcast %cst_48 : f32 to vector<8x128xf32>
    %101 = arith.maximumf %100, %99 : vector<8x128xf32>
    %102 = vector.broadcast %cst_49 : f32 to vector<8x128xf32>
    %103 = arith.minimumf %102, %101 : vector<8x128xf32>
    %cst_50 = arith.constant 0.000000e+00 : f32
    %104 = vector.broadcast %cst_50 : f32 to vector<8x128xf32>
    %105 = arith.subf %104, %103 : vector<8x128xf32>
    %106 = math.exp %105 : vector<8x128xf32>
    %cst_51 = arith.constant 1.000000e+00 : f32
    %107 = vector.broadcast %cst_51 : f32 to vector<8x128xf32>
    %108 = arith.subf %107, %106 : vector<8x128xf32>
    %109 = math.sqrt %108 : vector<8x128xf32>
    %c0_52 = arith.constant 0 : index
    %c0_53 = arith.constant 0 : index
    %c0_54 = arith.constant 0 : index
    %110 = vector.load %arg3[%c0_52, %c0_53, %c0_54] : memref<1x8x128xf32, #tpu.memory_space<vmem>>, vector<1x8x128xf32>
    %111 = vector.shape_cast %110 : vector<1x8x128xf32> to vector<8x128xf32>
    %112 = arith.mulf %109, %111 : vector<8x128xf32>
    %c0_55 = arith.constant 0 : index
    %c0_56 = arith.constant 0 : index
    %113 = vector.load %arg4[%c0_55, %c0_56] : memref<8x128xf32, #tpu.memory_space<vmem>>, vector<8x128xf32>
    tpu.vector_store %arg4[%c0_55, %c0_56], %112 {strides = array<i32>} : memref<8x128xf32, #tpu.memory_space<vmem>>, vector<8x128xf32>,
    return
  }
  func.func @transform_0(%arg0: i32) -> (i32, i32, i32, i32) {
    %c0_i32 = arith.constant 0 : i32
    %c0_i32_0 = arith.constant 0 : i32
    %c0_i32_1 = arith.constant 0 : i32
    %c0_i32_2 = arith.constant 0 : i32
    return %arg0, %c0_i32, %c0_i32_0, %c0_i32_1 : i32, i32, i32, i32
  }
  func.func @transform_1(%arg0: i32) -> (i32, i32, i32, i32) {
    %c0_i32 = arith.constant 0 : i32
    %c0_i32_0 = arith.constant 0 : i32
    %c0_i32_1 = arith.constant 0 : i32
    %c0_i32_2 = arith.constant 0 : i32
    return %arg0, %c0_i32, %c0_i32_0, %c0_i32_1 : i32, i32, i32, i32
  }
  func.func @transform_2(%arg0: i32) -> (i32, i32, i32) {
    %c0_i32 = arith.constant 0 : i32
    %c0_i32_0 = arith.constant 0 : i32
    %c0_i32_1 = arith.constant 0 : i32
    return %arg0, %c0_i32, %c0_i32_0 : i32, i32, i32
  }
  func.func @transform_3(%arg0: i32) -> (i32, i32) {
    %c0_i32 = arith.constant 0 : i32
    %c0_i32_0 = arith.constant 0 : i32
    return %arg0, %c0_i32 : i32, i32
  }
}

</mosaic_0001>

<llo_original>
// kernel: tpu_custom_call.1
$region0: #{tpu_custom_call.1}
  #allocation0 [shape = 'u32[]', space=smem, size = 0x4, offset = 0x4, fixed_abs, tag = 'smem constant byte address 0x4 - core index']
  #allocation1 [shape = 'u32[144,128]{1,0:T(1,128)}', space=vmem, size = 0x12000, scoped, tag = 'internal scratch']
  %s0 = inlined_call_operand.hbm [shape: f32[1,5,8,128], index: 0, kind: input, shape index: {}]
  %s1 = inlined_call_operand.hbm [shape: f32[1,5,8,128], index: 1, kind: input, shape index: {}]
  %s2 = inlined_call_operand.hbm [shape: f32[1,8,128], index: 2, kind: input, shape index: {}]
  %s3 = inlined_call_operand.hbm [shape: f32[8,128], index: 3, kind: output, shape index: {}]
  %s4 = sld [smem:[#allocation0]]
  $region34: #{tpu_custom_call.1} parent=0
    _
  %s6 = ssub.s32 1, %s4
  %s7 = scalar_select 0, %s6, %s4
  $region1: #{tpu_custom_call.1} parent=0
    #allocation2 [shape = 'u8[20480]{0}', space=vmem, size = 0x5000, scoped, tag = 'input window, operand 0, single buffered']
    #allocation3 [shape = 's32[1]{0}', space=sflag, size = 0x4, scoped, tag = 'scoped memory for tpu_custom_call.1']
    #allocation4 [shape = 's32[1]{0}', space=sflag, size = 0x4, scoped, tag = 'scoped memory for tpu_custom_call.1']
    #allocation5 [shape = 'u8[20480]{0}', space=vmem, size = 0x5000, scoped, tag = 'input window, operand 1, single buffered']
    #allocation6 [shape = 's32[1]{0}', space=sflag, size = 0x4, scoped, tag = 'scoped memory for tpu_custom_call.1']
    #allocation7 [shape = 'u8[4096]{0}', space=vmem, size = 0x1000, scoped, tag = 'input window, operand 2, single buffered']
    #allocation8 [shape = 'u8[4096]{0}', space=vmem, size = 0x1000, scoped, tag = 'output window, operand 0, single buffered']
    %8 = vsyncpa [#allocation3], 0
    %9 = vsyncpa [#allocation6], 0
    %10 = vsyncpa [#allocation4], 0
    // Predicated region
    $region2: #{tpu_custom_call.1} parent=1 // pred_check
      _
    $region3: #{tpu_custom_call.1} parent=1 // pred_check_branch
      %12 = sbr.rel (0) target = $region5
    $region4: #{tpu_custom_call.1} parent=1 // pred_region
      %s14 = ssub.s32 640, 640
      %15 = vsyncadd [#allocation3], %s14
      %s16 = sshll.u32 [#allocation2], 4
      %s17 = int_to_ptr.vmem [resolvable:$true] %s16
      %22 = dma.hbm_to_vmem [thread:$0]  %s0, 640, %s17, [#allocation3], 128, 128, 8
    $region5: #{tpu_custom_call.1} parent=1 // pred_fallthru
      _
    // Predicated region
    $region6: #{tpu_custom_call.1} parent=1 // pred_check
      _
    $region7: #{tpu_custom_call.1} parent=1 // pred_check_branch
      %24 = sbr.rel (0) target = $region9
    $region8: #{tpu_custom_call.1} parent=1 // pred_region
      %s26 = ssub.s32 640, 640
      %27 = vsyncadd [#allocation6], %s26
      %s28 = sshll.u32 [#allocation5], 4
      %s29 = int_to_ptr.vmem [resolvable:$true] %s28
      %34 = dma.hbm_to_vmem [thread:$0]  %s1, 640, %s29, [#allocation6], 128, 128, 8
    $region9: #{tpu_custom_call.1} parent=1 // pred_fallthru
      _
    // Predicated region
    $region10: #{tpu_custom_call.1} parent=1 // pred_check
      _
    $region11: #{tpu_custom_call.1} parent=1 // pred_check_branch
      %36 = sbr.rel (0) target = $region13
    $region12: #{tpu_custom_call.1} parent=1 // pred_region
      %s38 = ssub.s32 128, 128
      %39 = vsyncadd [#allocation6], %s38
      %s41 = sshll.u32 [#allocation7], 4
      %s42 = int_to_ptr.vmem [resolvable:$true] %s41
      %44 = dma.hbm_to_vmem [thread:$0]  %s2, 128, %s42, [#allocation6]
    $region13: #{tpu_custom_call.1} parent=1 // pred_fallthru
      _
    // Predicated region
    $region14: #{tpu_custom_call.1} parent=1 // pred_check
      _
    $region15: #{tpu_custom_call.1} parent=1 // pred_check_branch
      %46 = sbr.rel (0) target = $region17
    $region16: #{tpu_custom_call.1} parent=1 // pred_region
      %47 = dma.done [#allocation3], 640
    $region17: #{tpu_custom_call.1} parent=1 // pred_fallthru
      _
    // Predicated region
    $region18: #{tpu_custom_call.1} parent=1 // pred_check
      _
    $region19: #{tpu_custom_call.1} parent=1 // pred_check_branch
      %49 = sbr.rel (0) target = $region21
    $region20: #{tpu_custom_call.1} parent=1 // pred_region
      %50 = dma.done [#allocation6], 640
    $region21: #{tpu_custom_call.1} parent=1 // pred_fallthru
      _
    // Predicated region
    $region22: #{tpu_custom_call.1} parent=1 // pred_check
      _
    $region23: #{tpu_custom_call.1} parent=1 // pred_check_branch
      %52 = sbr.rel (0) target = $region25
    $region24: #{tpu_custom_call.1} parent=1 // pred_region
      %53 = dma.done [#allocation6], 128
    $region25: #{tpu_custom_call.1} parent=1 // pred_fallthru
      _
    %v54 = vld [vmem:[#allocation2] sm:$0xff]
    %s55 = scalar_lea.vmem [#allocation2], 8
    %v56 = vld [vmem:[%s55] sm:$0xff]
    %s57 = scalar_lea.vmem [#allocation2], 16
    %v58 = vld [vmem:[%s57] sm:$0xff]
    %v59 = vmul.f32 %v58, %v58
    %v60 = vmul.f32 %v59, 0.083333336
    %s61 = scalar_lea.vmem [#allocation2], 24
    %v62 = vld [vmem:[%s61] sm:$0xff]
    %v63 = vmul.f32 %v62, %v62
    %v64 = vmul.f32 %v63, 0.083333336
    %s65 = scalar_lea.vmem [#allocation2], 32
    %v66 = vld [vmem:[%s65] sm:$0xff]
    %v67 = vld [vmem:[#allocation5] sm:$0xff]
    %s68 = scalar_lea.vmem [#allocation5], 8
    %v69 = vld [vmem:[%s68] sm:$0xff]
    %s70 = scalar_lea.vmem [#allocation5], 16
    %v71 = vld [vmem:[%s70] sm:$0xff]
    %v72 = vmul.f32 %v71, %v71
    %v73 = vmul.f32 %v72, 0.083333336
    %s74 = scalar_lea.vmem [#allocation5], 24
    %v75 = vld [vmem:[%s74] sm:$0xff]
    %v76 = vmul.f32 %v75, %v75
    %v77 = vmul.f32 %v76, 0.083333336
    %s78 = scalar_lea.vmem [#allocation5], 32
    %v79 = vld [vmem:[%s78] sm:$0xff]
    %v80 = vadd.f32 %v66, %v66
    %v81 = vand.u32 2147483647, %v80
    %vm82 = vcmp.le.f32.partialorder %v81, 0.7853982
    %vm83 = vcmp.lt.s32.totalorder %v80, 0
    %v84 = vand.u32 %v80, 2139095040
    %v85 = vshrl.u32 %v84, 23
    %v86 = vsub.s32 %v85, 127
    %v87 = vand.u32 2147483647, %v80
    %v88 = vand.u32 %v87, 8388607
    %v89 = vor.u32 %v88, 8388608
    %v90 = vsub.s32 0, %v89
    %v91 = vadd.s32 %v86, 1
    %vm92 = vcmp.gt.s32.totalorder %v91, 0
    %v93 = vsel %vm92, %v91, 0
    %v94 = vshrl.u32 %v93, 5
    %v95 = vand.u32 %v93, 31
    %v96 = vsub.s32 32, %v95
    %v97 = vshrl.u32 683565275, %v96
    %v98 = vshll.u32 683565275, %v95
    %v99 = vshrl.u32 2475754826, %v96
    %v100 = vor.u32 %v98, %v99
    %v101 = vshll.u32 2475754826, %v95
    %v102 = vshrl.u32 2131351028, %v96
    %v103 = vor.u32 %v101, %v102
    %v104 = vshll.u32 2131351028, %v95
    %v105 = vshrl.u32 2102212464, %v96
    %v106 = vor.u32 %v104, %v105
    %v107 = vshll.u32 2102212464, %v95
    %v108 = vshrl.u32 920167782, %v96
    %v109 = vor.u32 %v107, %v108
    %v110 = vshll.u32 920167782, %v95
    %v111 = vshrl.u32 1326507024, %v96
    %v112 = vor.u32 %v110, %v111
    %vm113 = vcmp.lt.s32.totalorder %v94, 1
    %vm114 = vcmp.lt.s32.totalorder %v94, 2
    %vm115 = vcmp.lt.s32.totalorder %v94, 3
    %vm116 = vcmp.lt.s32.totalorder %v94, 4
    %v117 = vsel %vm113, %v97, %v100
    %v118 = vsel %vm116, %v106, 2102212464
    %v119 = vsel %vm115, %v103, %v118
    %v120 = vsel %vm114, %v117, %v119
    %v121 = vsel %vm113, %v100, %v103
    %v122 = vsel %vm116, %v109, 920167782
    %v123 = vsel %vm115, %v106, %v122
    %v124 = vsel %vm114, %v121, %v123
    %v125 = vsel %vm113, %v103, %v106
    %v126 = vsel %vm116, %v112, 1326507024
    %v127 = vsel %vm115, %v109, %v126
    %v128 = vsel %vm114, %v125, %v127
    %v129 = vshll.u32 %v89, 8
    %v130 = vmul.u32.u64.compose %v129, %v128
    %v131 = vextract.low.u32 %v130
    %v132 = vextract.high.u32 %v130
    %v133 = vmul.u32.u64.compose %v129, %v124
    %v134 = vextract.low.u32 %v133
    %v135 = vextract.high.u32 %v133
    %v136 = vmul.u32 %v129, %v120
    %v137 = vadd.s32 %v132, %v134
    %vm138 = vc.u32 %v132, %v134
    %v139 = vadd.s32 %v135, 1
    %v140 = vsel %vm138, %v139, %v135
    %v141 = vadd.s32 %v136, %v140
    %v142 = vadd.s32 %v141, 536870912
    %v143 = vshrl.u32 %v142, 30
    %v144 = vshll.u32 %v143, 30
    %v145 = vsub.s32 %v141, %v144
    %vm146 = vcmp.lt.s32.totalorder %v145, 0
    %v147 = vsub.s32 0, %v145
    %v148 = vsel %vm146, %v147, %v145
    %v149 = vclz %v148
    %v150 = vsub.s32 %v149, 2
    %vm151 = vcmp.gt.s32.totalorder 0, %v150
    %v152 = vsel %vm151, 0, %v150
    %v153 = vsub.s32 32, %v152
    %v154 = vshll.u32 %v145, %v152
    %v155 = vshrl.u32 %v137, %v153
    %v156 = vor.u32 %v154, %v155
    %v157 = vsub.s32 4294967266, %v152
    %v158 = vadd.s32 %v157, 127
    %v159 = vshll.u32 %v158, 23
    %v160 = vor.u32 4788187, %v159
    %v161 = vand.u32 2147483647, %v160
    %v163 = vcvt.s32.f32 %v156
    %v164 = vmul.f32 %v163, %v161
    %v165 = vxor.u32 %v164, 2147483648
    %v166 = vsel %vm83, %v165, %v164
    %v167 = vsub.s32 4, %v143
    %v168 = vsel %vm83, %v167, %v143
    %v169 = vsel %vm82, %v80, %v166
    %v170 = vsel %vm82, 0, %v168
    %v171 = vcosq.f32.pop %v169
    %v172 = vsinq.f32.pop %v169
    %vm173 = vweird.f32 %v80
    %v174 = vand.u32 %v170, 3
    %vm175 = vcmp.lt.s32.totalorder %v174, 2
    %vm176 = vcmp.eq.s32.totalorder %v174, 0
    %v177 = vxor.u32 %v172, 2147483648
    %v178 = vsel %vm176, %v171, %v177
    %vm179 = vcmp.eq.s32.totalorder %v174, 2
    %v180 = vxor.u32 %v171, 2147483648
    %v181 = vsel %vm179, %v180, %v172
    %v182 = vsel %vm175, %v178, %v181
    %v183 = vsel %vm173, nan, %v182
    %v184 = vand.u32 2147483647, %v80
    %vm185 = vcmp.le.f32.partialorder %v184, 0.7853982
    %vm186 = vcmp.lt.s32.totalorder %v80, 0
    %v187 = vand.u32 %v80, 2139095040
    %v188 = vshrl.u32 %v187, 23
    %v189 = vsub.s32 %v188, 127
    %v190 = vand.u32 2147483647, %v80
    %v191 = vand.u32 %v190, 8388607
    %v192 = vor.u32 %v191, 8388608
    %v193 = vsub.s32 0, %v192
    %v194 = vadd.s32 %v189, 1
    %vm195 = vcmp.gt.s32.totalorder %v194, 0
    %v196 = vsel %vm195, %v194, 0
    %v197 = vshrl.u32 %v196, 5
    %v198 = vand.u32 %v196, 31
    %v199 = vsub.s32 32, %v198
    %v200 = vshrl.u32 683565275, %v199
    %v201 = vshll.u32 683565275, %v198
    %v202 = vshrl.u32 2475754826, %v199
    %v203 = vor.u32 %v201, %v202
    %v204 = vshll.u32 2475754826, %v198
    %v205 = vshrl.u32 2131351028, %v199
    %v206 = vor.u32 %v204, %v205
    %v207 = vshll.u32 2131351028, %v198
    %v208 = vshrl.u32 2102212464, %v199
    %v209 = vor.u32 %v207, %v208
    %v210 = vshll.u32 2102212464, %v198
    %v211 = vshrl.u32 920167782, %v199
    %v212 = vor.u32 %v210, %v211
    %v213 = vshll.u32 920167782, %v198
    %v214 = vshrl.u32 1326507024, %v199
    %v215 = vor.u32 %v213, %v214
    %vm216 = vcmp.lt.s32.totalorder %v197, 1
    %vm217 = vcmp.lt.s32.totalorder %v197, 2
    %vm218 = vcmp.lt.s32.totalorder %v197, 3
    %vm219 = vcmp.lt.s32.totalorder %v197, 4
    %v220 = vsel %vm216, %v200, %v203
    %v221 = vsel %vm219, %v209, 2102212464
    %v222 = vsel %vm218, %v206, %v221
    %v223 = vsel %vm217, %v220, %v222
    %v224 = vsel %vm216, %v203, %v206
    %v225 = vsel %vm219, %v212, 920167782
    %v226 = vsel %vm218, %v209, %v225
    %v227 = vsel %vm217, %v224, %v226
    %v228 = vsel %vm216, %v206, %v209
    %v229 = vsel %vm219, %v215, 1326507024
    %v230 = vsel %vm218, %v212, %v229
    %v231 = vsel %vm217, %v228, %v230
    %v232 = vshll.u32 %v192, 8
    %v233 = vmul.u32.u64.compose %v232, %v231
    %v234 = vextract.low.u32 %v233
    %v235 = vextract.high.u32 %v233
    %v236 = vmul.u32.u64.compose %v232, %v227
    %v237 = vextract.low.u32 %v236
    %v238 = vextract.high.u32 %v236
    %v239 = vmul.u32 %v232, %v223
    %v240 = vadd.s32 %v235, %v237
    %vm241 = vc.u32 %v235, %v237
    %v242 = vadd.s32 %v238, 1
    %v243 = vsel %vm241, %v242, %v238
    %v244 = vadd.s32 %v239, %v243
    %v245 = vadd.s32 %v244, 536870912
    %v246 = vshrl.u32 %v245, 30
    %v247 = vshll.u32 %v246, 30
    %v248 = vsub.s32 %v244, %v247
    %vm249 = vcmp.lt.s32.totalorder %v248, 0
    %v250 = vsub.s32 0, %v248
    %v251 = vsel %vm249, %v250, %v248
    %v252 = vclz %v251
    %v253 = vsub.s32 %v252, 2
    %vm254 = vcmp.gt.s32.totalorder 0, %v253
    %v255 = vsel %vm254, 0, %v253
    %v256 = vsub.s32 32, %v255
    %v257 = vshll.u32 %v248, %v255
    %v258 = vshrl.u32 %v240, %v256
    %v259 = vor.u32 %v257, %v258
    %v260 = vsub.s32 4294967266, %v255
    %v261 = vadd.s32 %v260, 127
    %v262 = vshll.u32 %v261, 23
    %v263 = vor.u32 4788187, %v262
    %v264 = vand.u32 2147483647, %v263
    %v266 = vcvt.s32.f32 %v259
    %v267 = vmul.f32 %v266, %v264
    %v268 = vxor.u32 %v267, 2147483648
    %v269 = vsel %vm186, %v268, %v267
    %v270 = vsub.s32 4, %v246
    %v271 = vsel %vm186, %v270, %v246
    %v272 = vsel %vm185, %v80, %v269
    %v273 = vsel %vm185, 0, %v271
    %v274 = vcosq.f32.pop %v272
    %v275 = vsinq.f32.pop %v272
    %vm276 = vweird.f32 %v80
    %v277 = vadd.s32 %v273, 3
    %v278 = vand.u32 %v277, 3
    %vm279 = vcmp.lt.s32.totalorder %v278, 2
    %vm280 = vcmp.eq.s32.totalorder %v278, 0
    %v281 = vxor.u32 %v275, 2147483648
    %v282 = vsel %vm280, %v274, %v281
    %vm283 = vcmp.eq.s32.totalorder %v278, 2
    %v284 = vxor.u32 %v274, 2147483648
    %v285 = vsel %vm283, %v284, %v275
    %v286 = vsel %vm279, %v282, %v285
    %v287 = vsel %vm276, nan, %v286
    %v288 = vadd.f32 %v60, %v64
    %v289 = vmul.f32 %v288, 0.5
    %v290 = vsub.f32 %v60, %v64
    %v291 = vmul.f32 %v290, 0.5
    %v292 = vmul.f32 %v291, %v183
    %v293 = vadd.f32 %v289, %v292
    %v294 = vsub.f32 %v289, %v292
    %v295 = vmul.f32 %v291, %v287
    %v296 = vadd.f32 %v79, %v79
    %v297 = vand.u32 2147483647, %v296
    %vm298 = vcmp.le.f32.partialorder %v297, 0.7853982
    %vm299 = vcmp.lt.s32.totalorder %v296, 0
    %v300 = vand.u32 %v296, 2139095040
    %v301 = vshrl.u32 %v300, 23
    %v302 = vsub.s32 %v301, 127
    %v303 = vand.u32 2147483647, %v296
    %v304 = vand.u32 %v303, 8388607
    %v305 = vor.u32 %v304, 8388608
    %v306 = vsub.s32 0, %v305
    %v307 = vadd.s32 %v302, 1
    %vm308 = vcmp.gt.s32.totalorder %v307, 0
    %v309 = vsel %vm308, %v307, 0
    %v310 = vshrl.u32 %v309, 5
    %v311 = vand.u32 %v309, 31
    %v312 = vsub.s32 32, %v311
    %v313 = vshrl.u32 683565275, %v312
    %v314 = vshll.u32 683565275, %v311
    %v315 = vshrl.u32 2475754826, %v312
    %v316 = vor.u32 %v314, %v315
    %v317 = vshll.u32 2475754826, %v311
    %v318 = vshrl.u32 2131351028, %v312
    %v319 = vor.u32 %v317, %v318
    %v320 = vshll.u32 2131351028, %v311
    %v321 = vshrl.u32 2102212464, %v312
    %v322 = vor.u32 %v320, %v321
    %v323 = vshll.u32 2102212464, %v311
    %v324 = vshrl.u32 920167782, %v312
    %v325 = vor.u32 %v323, %v324
    %v326 = vshll.u32 920167782, %v311
    %v327 = vshrl.u32 1326507024, %v312
    %v328 = vor.u32 %v326, %v327
    %vm329 = vcmp.lt.s32.totalorder %v310, 1
    %vm330 = vcmp.lt.s32.totalorder %v310, 2
    %vm331 = vcmp.lt.s32.totalorder %v310, 3
    %vm332 = vcmp.lt.s32.totalorder %v310, 4
    %v333 = vsel %vm329, %v313, %v316
    %v334 = vsel %vm332, %v322, 2102212464
    %v335 = vsel %vm331, %v319, %v334
    %v336 = vsel %vm330, %v333, %v335
    %v337 = vsel %vm329, %v316, %v319
    %v338 = vsel %vm332, %v325, 920167782
    %v339 = vsel %vm331, %v322, %v338
    %v340 = vsel %vm330, %v337, %v339
    %v341 = vsel %vm329, %v319, %v322
    %v342 = vsel %vm332, %v328, 1326507024
    %v343 = vsel %vm331, %v325, %v342
    %v344 = vsel %vm330, %v341, %v343
    %v345 = vshll.u32 %v305, 8
    %v346 = vmul.u32.u64.compose %v345, %v344
    %v347 = vextract.low.u32 %v346
    %v348 = vextract.high.u32 %v346
    %v349 = vmul.u32.u64.compose %v345, %v340
    %v350 = vextract.low.u32 %v349
    %v351 = vextract.high.u32 %v349
    %v352 = vmul.u32 %v345, %v336
    %v353 = vadd.s32 %v348, %v350
    %vm354 = vc.u32 %v348, %v350
    %v355 = vadd.s32 %v351, 1
    %v356 = vsel %vm354, %v355, %v351
    %v357 = vadd.s32 %v352, %v356
    %v358 = vadd.s32 %v357, 536870912
    %v359 = vshrl.u32 %v358, 30
    %v360 = vshll.u32 %v359, 30
    %v361 = vsub.s32 %v357, %v360
    %vm362 = vcmp.lt.s32.totalorder %v361, 0
    %v363 = vsub.s32 0, %v361
    %v364 = vsel %vm362, %v363, %v361
    %v365 = vclz %v364
    %v366 = vsub.s32 %v365, 2
    %vm367 = vcmp.gt.s32.totalorder 0, %v366
    %v368 = vsel %vm367, 0, %v366
    %v369 = vsub.s32 32, %v368
    %v370 = vshll.u32 %v361, %v368
    %v371 = vshrl.u32 %v353, %v369
    %v372 = vor.u32 %v370, %v371
    %v373 = vsub.s32 4294967266, %v368
    %v374 = vadd.s32 %v373, 127
    %v375 = vshll.u32 %v374, 23
    %v376 = vor.u32 4788187, %v375
    %v377 = vand.u32 2147483647, %v376
    %v379 = vcvt.s32.f32 %v372
    %v380 = vmul.f32 %v379, %v377
    %v381 = vxor.u32 %v380, 2147483648
    %v382 = vsel %vm299, %v381, %v380
    %v383 = vsub.s32 4, %v359
    %v384 = vsel %vm299, %v383, %v359
    %v385 = vsel %vm298, %v296, %v382
    %v386 = vsel %vm298, 0, %v384
    %v387 = vcosq.f32.pop %v385
    %v388 = vsinq.f32.pop %v385
    %vm389 = vweird.f32 %v296
    %v390 = vand.u32 %v386, 3
    %vm391 = vcmp.lt.s32.totalorder %v390, 2
    %vm392 = vcmp.eq.s32.totalorder %v390, 0
    %v393 = vxor.u32 %v388, 2147483648
    %v394 = vsel %vm392, %v387, %v393
    %vm395 = vcmp.eq.s32.totalorder %v390, 2
    %v396 = vxor.u32 %v387, 2147483648
    %v397 = vsel %vm395, %v396, %v388
    %v398 = vsel %vm391, %v394, %v397
    %v399 = vsel %vm389, nan, %v398
    %v400 = vand.u32 2147483647, %v296
    %vm401 = vcmp.le.f32.partialorder %v400, 0.7853982
    %vm402 = vcmp.lt.s32.totalorder %v296, 0
    %v403 = vand.u32 %v296, 2139095040
    %v404 = vshrl.u32 %v403, 23
    %v405 = vsub.s32 %v404, 127
    %v406 = vand.u32 2147483647, %v296
    %v407 = vand.u32 %v406, 8388607
    %v408 = vor.u32 %v407, 8388608
    %v409 = vsub.s32 0, %v408
    %v410 = vadd.s32 %v405, 1
    %vm411 = vcmp.gt.s32.totalorder %v410, 0
    %v412 = vsel %vm411, %v410, 0
    %v413 = vshrl.u32 %v412, 5
    %v414 = vand.u32 %v412, 31
    %v415 = vsub.s32 32, %v414
    %v416 = vshrl.u32 683565275, %v415
    %v417 = vshll.u32 683565275, %v414
    %v418 = vshrl.u32 2475754826, %v415
    %v419 = vor.u32 %v417, %v418
    %v420 = vshll.u32 2475754826, %v414
    %v421 = vshrl.u32 2131351028, %v415
    %v422 = vor.u32 %v420, %v421
    %v423 = vshll.u32 2131351028, %v414
    %v424 = vshrl.u32 2102212464, %v415
    %v425 = vor.u32 %v423, %v424
    %v426 = vshll.u32 2102212464, %v414
    %v427 = vshrl.u32 920167782, %v415
    %v428 = vor.u32 %v426, %v427
    %v429 = vshll.u32 920167782, %v414
    %v430 = vshrl.u32 1326507024, %v415
    %v431 = vor.u32 %v429, %v430
    %vm432 = vcmp.lt.s32.totalorder %v413, 1
    %vm433 = vcmp.lt.s32.totalorder %v413, 2
    %vm434 = vcmp.lt.s32.totalorder %v413, 3
    %vm435 = vcmp.lt.s32.totalorder %v413, 4
    %v436 = vsel %vm432, %v416, %v419
    %v437 = vsel %vm435, %v425, 2102212464
    %v438 = vsel %vm434, %v422, %v437
    %v439 = vsel %vm433, %v436, %v438
    %v440 = vsel %vm432, %v419, %v422
    %v441 = vsel %vm435, %v428, 920167782
    %v442 = vsel %vm434, %v425, %v441
    %v443 = vsel %vm433, %v440, %v442
    %v444 = vsel %vm432, %v422, %v425
    %v445 = vsel %vm435, %v431, 1326507024
    %v446 = vsel %vm434, %v428, %v445
    %v447 = vsel %vm433, %v444, %v446
    %v448 = vshll.u32 %v408, 8
    %v449 = vmul.u32.u64.compose %v448, %v447
    %v450 = vextract.low.u32 %v449
    %v451 = vextract.high.u32 %v449
    %v452 = vmul.u32.u64.compose %v448, %v443
    %v453 = vextract.low.u32 %v452
    %v454 = vextract.high.u32 %v452
    %v455 = vmul.u32 %v448, %v439
    %v456 = vadd.s32 %v451, %v453
    %vm457 = vc.u32 %v451, %v453
    %v458 = vadd.s32 %v454, 1
    %v459 = vsel %vm457, %v458, %v454
    %v460 = vadd.s32 %v455, %v459
    %v461 = vadd.s32 %v460, 536870912
    %v462 = vshrl.u32 %v461, 30
    %v463 = vshll.u32 %v462, 30
    %v464 = vsub.s32 %v460, %v463
    %vm465 = vcmp.lt.s32.totalorder %v464, 0
    %v466 = vsub.s32 0, %v464
    %v467 = vsel %vm465, %v466, %v464
    %v468 = vclz %v467
    %v469 = vsub.s32 %v468, 2
    %vm470 = vcmp.gt.s32.totalorder 0, %v469
    %v471 = vsel %vm470, 0, %v469
    %v472 = vsub.s32 32, %v471
    %v473 = vshll.u32 %v464, %v471
    %v474 = vshrl.u32 %v456, %v472
    %v475 = vor.u32 %v473, %v474
    %v476 = vsub.s32 4294967266, %v471
    %v477 = vadd.s32 %v476, 127
    %v478 = vshll.u32 %v477, 23
    %v479 = vor.u32 4788187, %v478
    %v480 = vand.u32 2147483647, %v479
    %v482 = vcvt.s32.f32 %v475
    %v483 = vmul.f32 %v482, %v480
    %v484 = vxor.u32 %v483, 2147483648
    %v485 = vsel %vm402, %v484, %v483
    %v486 = vsub.s32 4, %v462
    %v487 = vsel %vm402, %v486, %v462
    %v488 = vsel %vm401, %v296, %v485
    %v489 = vsel %vm401, 0, %v487
    %v490 = vcosq.f32.pop %v488
    %v491 = vsinq.f32.pop %v488
    %vm492 = vweird.f32 %v296
    %v493 = vadd.s32 %v489, 3
    %v494 = vand.u32 %v493, 3
    %vm495 = vcmp.lt.s32.totalorder %v494, 2
    %vm496 = vcmp.eq.s32.totalorder %v494, 0
    %v497 = vxor.u32 %v491, 2147483648
    %v498 = vsel %vm496, %v490, %v497
    %vm499 = vcmp.eq.s32.totalorder %v494, 2
    %v500 = vxor.u32 %v490, 2147483648
    %v501 = vsel %vm499, %v500, %v491
    %v502 = vsel %vm495, %v498, %v501
    %v503 = vsel %vm492, nan, %v502
    %v504 = vadd.f32 %v73, %v77
    %v505 = vmul.f32 %v504, 0.5
    %v506 = vsub.f32 %v73, %v77
    %v507 = vmul.f32 %v506, 0.5
    %v508 = vmul.f32 %v507, %v399
    %v509 = vadd.f32 %v505, %v508
    %v510 = vsub.f32 %v505, %v508
    %v511 = vmul.f32 %v507, %v503
    %v512 = vsub.f32 %v54, %v67
    %v513 = vsub.f32 %v56, %v69
    %v514 = vadd.f32 %v293, %v509
    %v515 = vadd.f32 %v294, %v510
    %v516 = vadd.f32 %v295, %v511
    %v517 = vmul.f32 %v514, %v513
    %v518 = vmul.f32 %v517, %v513
    %v519 = vmul.f32 %v515, %v512
    %v520 = vmul.f32 %v519, %v512
    %v521 = vadd.f32 %v518, %v520
    %v522 = vmul.f32 %v521, 0.25
    %v523 = vmul.f32 %v516, %v512
    %v524 = vmul.f32 %v523, %v513
    %v525 = vmul.f32 %v524, 0.5
    %v526 = vsub.f32 %v522, %v525
    %v527 = vmul.f32 %v514, %v515
    %v528 = vmul.f32 %v516, %v516
    %v529 = vsub.f32 %v527, %v528
    %v530 = vmul.f32 %v293, %v294
    %v531 = vmul.f32 %v295, %v295
    %v532 = vsub.f32 %v530, %v531
    %v533 = vmul.f32 %v509, %v510
    %v534 = vmul.f32 %v511, %v511
    %v535 = vsub.f32 %v533, %v534
    %v536 = vmul.f32 %v532, %v535
    %v537 = vmax.f32 %v536, 0.0
    %v538 = vrsqrt.pop %v537
    %v539 = vmul.f32 %v537, %v538
    %vm540 = vcmp.eq.f32.partialorder %v537, inf
    %v541 = vsel %vm540, %v537, %v539
    %vm542 = vcmp.eq.f32.partialorder %v537, 0.0
    %v543 = vand.u32 %v537, 2147483648
    %v544 = vsel %vm542, %v543, %v541
    %v545 = vmul.f32 %v544, 4.0
    %v546 = vadd.f32 %v545, 0.001
    %v547 = vrcp.pop %v529
    %v548 = vrcp.pop %v546
    %v549 = vmul.f32 %v529, %v548
    %v550 = vlog2.pop %v549
    %v551 = vmul.f32 %v550, 0.6931472
    %v552 = vmul.f32 %v551, 0.5
    %v553 = vmul.f32 %v526, %v547
    %v554 = vadd.f32 %v553, %v552
    %v555 = vmax.f32 %v554, 0.001
    %v556 = vmin.f32 %v555, 100.0
    %v557 = vsub.f32 0.0, %v556
    %v558 = vmul.f32 %v557, 1.442695
    %v559 = vpow.pop %v558
    %v560 = vsub.f32 1.0, %v559
    %v561 = vrsqrt.pop %v560
    %v562 = vmul.f32 %v560, %v561
    %vm563 = vcmp.eq.f32.partialorder %v560, inf
    %v564 = vsel %vm563, %v560, %v562
    %vm565 = vcmp.eq.f32.partialorder %v560, 0.0
    %v566 = vand.u32 %v560, 2147483648
    %v567 = vsel %vm565, %v566, %v564
    %v568 = vld [vmem:[#allocation7] sm:$0xff]
    %v569 = vmul.f32 %v567, %v568
    %570 = vst [vmem:[#allocation8] sm:$0xff] %v569
    // Predicated region
    $region26: #{tpu_custom_call.1} parent=1 // pred_check
      _
    $region27: #{tpu_custom_call.1} parent=1 // pred_check_branch
      %572 = sbr.rel (0) target = $region29
    $region28: #{tpu_custom_call.1} parent=1 // pred_region
      %s574 = ssub.s32 128, 128
      %575 = vsyncadd [#allocation4], %s574
      %s577 = sshll.u32 [#allocation8], 4
      %s578 = int_to_ptr.vmem [resolvable:$true] %s577
      %580 = dma.vmem_to_hbm [thread:$0]  %s578, 128, %s3, [#allocation4]
    $region29: #{tpu_custom_call.1} parent=1 // pred_fallthru
      _
    // Predicated region
    $region30: #{tpu_custom_call.1} parent=1 // pred_check
      _
    $region31: #{tpu_custom_call.1} parent=1 // pred_check_branch
      %582 = sbr.rel (0) target = $region33
    $region32: #{tpu_custom_call.1} parent=1 // pred_region
      %583 = dma.done [#allocation4], 128
    $region33: #{tpu_custom_call.1} parent=1 // pred_fallthru
      _
    %584 = vsyncpa [#allocation3], 1
    %585 = vsyncpa [#allocation6], 1
    %586 = vsyncpa [#allocation4], 1

</llo_original>
